<compile_context>
chip_gen: v6e
topology: v6e:2x2x1
jax: 0.10.0
libtpu: 0.0.40
codegen_flags: <defaults>
</compile_context>

<pallas_src>
import jax
import jax.numpy as jnp
from jax.experimental import pallas as pl
from jax.experimental.pallas import tpu as pltpu

CURRENT_DIFFUSION_STEPS = 1000.0  # the module references a global `current_diffusion_steps`

# Safe on every generation: well under v5e/v6e physical VMEM (128 MiB) and
# under v7x physical VMEM (64 MiB).
_VMEM_LIMIT_BYTES = 48 * 1024 * 1024


def _round_up(x, m):
    return ((x + m - 1) // m) * m


def _mlp_kernel(x_ref, tn_ref, w1x_ref, w1t_ref, b1_ref, w2_ref, b2_ref,
                w3_ref, b3_ref, o_ref):
    x = x_ref[...]       # [TB, D]
    tn = tn_ref[...]     # [TB, 1]

    # fc1: MXU matmul on the x part + rank-1 time contribution on the VPU.
    h = jnp.dot(x, w1x_ref[...], preferred_element_type=jnp.float32)
    h = h + tn * w1t_ref[...] + b1_ref[...]
    h = jnp.maximum(h, 0.0)          # ReLU; dropout = identity (eval mode)

    # fc2 + ReLU
    h = jnp.dot(h, w2_ref[...], preferred_element_type=jnp.float32) + b2_ref[...]
    h = jnp.maximum(h, 0.0)

    # fc3
    out = jnp.dot(h, w3_ref[...], preferred_element_type=jnp.float32) + b3_ref[...]
    o_ref[...] = out.astype(o_ref.dtype)


def _choose_batch_tile(B, D, H2):
    """Pick the largest 8-aligned batch tile that fits the VMEM budget."""
    # Weights/biases (conservatively assume double-buffered by the pipeline).
    weight_bytes = 4 * (D * H2 + H2 + H2 + H2 * H2 + H2 + H2 * D + D) * 2
    # Per-batch-row cost: double-buffered x/t/out tiles + fc1/fc2 hidden acts.
    per_row = 4 * (2 * (D + 1) + 2 * D + 3 * H2)
    budget = max((_VMEM_LIMIT_BYTES * 3) // 4 - weight_bytes, 1 << 20)
    tb = max(8, min(1024, (budget // per_row) // 8 * 8))
    return tb


def diffusion_mlp_v3_forward(x, t, params, *,
                             diffusion_steps=CURRENT_DIFFUSION_STEPS,
                             batch_tile=None):
    """x: [B, input_dim] float32, t: [B] int32. Returns [B, input_dim] float32."""
    w1, b1, w2, b2, w3, b3 = params
    B, D = x.shape
    H2 = w1.shape[1]
    assert w1.shape[0] == D + 1

    # Split fc1's weight so no [B, D+1] concat is ever materialized in HBM.
    w1x = w1[:D]          # [D, 2H]
    w1t = w1[D:D + 1]     # [1, 2H]

    t_norm = (t.astype(jnp.float32) / diffusion_steps)[:, None]   # [B, 1]

    # ----- batch tiling (pad ragged tail to full, 8-aligned tiles) ----------
    if batch_tile is None:
        batch_tile = _choose_batch_tile(B, D, H2)
    TB = min(batch_tile, _round_up(B, 8))
    B_pad = _round_up(B, TB)
    if B_pad != B:
        x = jnp.pad(x, ((0, B_pad - B), (0, 0)))
        t_norm = jnp.pad(t_norm, ((0, B_pad - B), (0, 0)))

    grid = (B_pad // TB,)
    tiled = lambda i: (i, 0)       # activations walk the batch axis
    resident = lambda i: (0, 0)    # weights/biases: same block every step

    out = pl.pallas_call(
        _mlp_kernel,
        out_shape=jax.ShapeDtypeStruct((B_pad, D), jnp.float32),
        grid=grid,
        in_specs=[
            pl.BlockSpec((TB, D), tiled),       # x
            pl.BlockSpec((TB, 1), tiled),       # t_norm
            pl.BlockSpec((D, H2), resident),    # w1_x
            pl.BlockSpec((1, H2), resident),    # w1_t
            pl.BlockSpec((1, H2), resident),    # b1
            pl.BlockSpec((H2, H2), resident),   # w2
            pl.BlockSpec((1, H2), resident),    # b2
            pl.BlockSpec((H2, D), resident),    # w3
            pl.BlockSpec((1, D), resident),     # b3
        ],
        out_specs=pl.BlockSpec((TB, D), tiled),
        compiler_params=pltpu.CompilerParams(
            dimension_semantics=("parallel",),
            vmem_limit_bytes=_VMEM_LIMIT_BYTES,
        ),
    )(x, t_norm, w1x, w1t, b1, w2, b2, w3, b3)

    return out[:B]


def init_params(key, input_dim, hidden_dim):
    """Deterministic init matching nn.Linear shapes (stored as [in, out])."""
    h2 = hidden_dim * 2
    k = jax.random.split(key, 6)

    def linear(kw, kb, fan_in, fan_out):
        bound = 1.0 / jnp.sqrt(fan_in)
        w = jax.random.uniform(kw, (fan_in, fan_out), jnp.float32, -bound, bound)
        b = jax.random.uniform(kb, (1, fan_out), jnp.float32, -bound, bound)
        return w, b

    w1, b1 = linear(k[0], k[1], input_dim + 1, h2)
    w2, b2 = linear(k[2], k[3], h2, h2)
    w3, b3 = linear(k[4], k[5], h2, input_dim)
    return (w1, b1, w2, b2, w3, b3)


def _reference_forward(x, t, params, diffusion_steps=CURRENT_DIFFUSION_STEPS):
    w1, b1, w2, b2, w3, b3 = params
    t_norm = (t.astype(jnp.float32) / diffusion_steps)[:, None]
    h = jnp.concatenate([x, t_norm], axis=1)
    h = jnp.maximum(h @ w1 + b1, 0.0)
    h = jnp.maximum(h @ w2 + b2, 0.0)
    return h @ w3 + b3


if __name__ == "__main__":
    batch = 8
    input_dim = 16
    hidden_dim = 32  # fc1/fc2 width = 2 * hidden_dim = 64

    key = jax.random.PRNGKey(0)
    kx, kt, kp = jax.random.split(key, 3)

    x = jax.random.normal(kx, (batch, input_dim), dtype=jnp.float32)
    t = jax.random.randint(kt, (batch,), 0, int(CURRENT_DIFFUSION_STEPS), dtype=jnp.int32)
    params = init_params(kp, input_dim, hidden_dim)

    out = diffusion_mlp_v3_forward(x, t, params)
    out = jax.block_until_ready(out)

    ref = _reference_forward(x, t, params)
    assert out.shape == (batch, input_dim)
    assert jnp.allclose(out, ref, atol=1e-4, rtol=1e-4), float(jnp.max(jnp.abs(out - ref)))

    print("KERNEL_OK")
</pallas_src>

<mosaic_0001>
module attributes {stable_mosaic.version = 11 : i64} {
  func.func @_mlp_kernel(%arg0: i32, %arg1: memref<8x16xf32, #tpu.memory_space<vmem>>, %arg2: memref<8x1xf32, #tpu.memory_space<vmem>>, %arg3: memref<16x64xf32, #tpu.memory_space<vmem>>, %arg4: memref<1x64xf32, #tpu.memory_space<vmem>>, %arg5: memref<1x64xf32, #tpu.memory_space<vmem>>, %arg6: memref<64x64xf32, #tpu.memory_space<vmem>>, %arg7: memref<1x64xf32, #tpu.memory_space<vmem>>, %arg8: memref<64x16xf32, #tpu.memory_space<vmem>>, %arg9: memref<1x16xf32, #tpu.memory_space<vmem>>, %arg10: memref<8x16xf32, #tpu.memory_space<vmem>>) attributes {dimension_semantics = [#tpu.dimension_semantics<parallel>], iteration_bounds = array<i64: 1>, scalar_prefetch = 0 : i64, scratch_operands = 0 : i64, tpu.core_type = #tpu.core_type<tc>, window_params = [{transform_indices = @transform_0, window_bounds = array<i64: 8, 16>}, {transform_indices = @transform_1, window_bounds = array<i64: 8, 1>}, {pipeline_mode = #tpu.pipeline_mode<synchronous>, transform_indices = @transform_2, window_bounds = array<i64: 16, 64>}, {pipeline_mode = #tpu.pipeline_mode<synchronous>, transform_indices = @transform_3, window_bounds = array<i64: 1, 64>}, {pipeline_mode = #tpu.pipeline_mode<synchronous>, transform_indices = @transform_4, window_bounds = array<i64: 1, 64>}, {pipeline_mode = #tpu.pipeline_mode<synchronous>, transform_indices = @transform_5, window_bounds = array<i64: 64, 64>}, {pipeline_mode = #tpu.pipeline_mode<synchronous>, transform_indices = @transform_6, window_bounds = array<i64: 1, 64>}, {pipeline_mode = #tpu.pipeline_mode<synchronous>, transform_indices = @transform_7, window_bounds = array<i64: 64, 16>}, {pipeline_mode = #tpu.pipeline_mode<synchronous>, transform_indices = @transform_8, window_bounds = array<i64: 1, 16>}, {transform_indices = @transform_9, window_bounds = array<i64: 8, 16>}]} {
    %c0 = arith.constant 0 : index
    %c0_0 = arith.constant 0 : index
    %0 = vector.load %arg1[%c0, %c0_0] : memref<8x16xf32, #tpu.memory_space<vmem>>, vector<8x16xf32>
    %c0_1 = arith.constant 0 : index
    %c0_2 = arith.constant 0 : index
    %1 = vector.load %arg2[%c0_1, %c0_2] : memref<8x1xf32, #tpu.memory_space<vmem>>, vector<8x1xf32>
    %c0_3 = arith.constant 0 : index
    %c0_4 = arith.constant 0 : index
    %2 = vector.load %arg3[%c0_3, %c0_4] : memref<16x64xf32, #tpu.memory_space<vmem>>, vector<16x64xf32>
    %cst = arith.constant dense<0.000000e+00> : vector<8x64xf32>
    %3 = tpu.matmul %0, %2, %cst {dimension_numbers = #tpu.dot_dimension_numbers<[1], [0], [0], [1], [0, 0, 1, 1], [], []>} : vector<8x16xf32>, vector<16x64xf32>, vector<8x64xf32> -> vector<8x64xf32>
    %c0_5 = arith.constant 0 : index
    %c0_6 = arith.constant 0 : index
    %4 = vector.load %arg4[%c0_5, %c0_6] : memref<1x64xf32, #tpu.memory_space<vmem>>, vector<1x64xf32>
    %5 = vector.broadcast %1 : vector<8x1xf32> to vector<8x64xf32>
    %6 = vector.broadcast %4 : vector<1x64xf32> to vector<8x64xf32>
    %7 = arith.mulf %5, %6 : vector<8x64xf32>
    %8 = arith.addf %3, %7 : vector<8x64xf32>
    %c0_7 = arith.constant 0 : index
    %c0_8 = arith.constant 0 : index
    %9 = vector.load %arg5[%c0_7, %c0_8] : memref<1x64xf32, #tpu.memory_space<vmem>>, vector<1x64xf32>
    %10 = vector.broadcast %9 : vector<1x64xf32> to vector<8x64xf32>
    %11 = arith.addf %8, %10 : vector<8x64xf32>
    %cst_9 = arith.constant 0.000000e+00 : f32
    %12 = vector.broadcast %cst_9 : f32 to vector<8x64xf32>
    %13 = arith.maximumf %11, %12 : vector<8x64xf32>
    %c0_10 = arith.constant 0 : index
    %c0_11 = arith.constant 0 : index
    %14 = vector.load %arg6[%c0_10, %c0_11] : memref<64x64xf32, #tpu.memory_space<vmem>>, vector<64x64xf32>
    %cst_12 = arith.constant dense<0.000000e+00> : vector<8x64xf32>
    %15 = tpu.matmul %13, %14, %cst_12 {dimension_numbers = #tpu.dot_dimension_numbers<[1], [0], [0], [1], [0, 0, 1, 1], [], []>} : vector<8x64xf32>, vector<64x64xf32>, vector<8x64xf32> -> vector<8x64xf32>
    %c0_13 = arith.constant 0 : index
    %c0_14 = arith.constant 0 : index
    %16 = vector.load %arg7[%c0_13, %c0_14] : memref<1x64xf32, #tpu.memory_space<vmem>>, vector<1x64xf32>
    %17 = vector.broadcast %16 : vector<1x64xf32> to vector<8x64xf32>
    %18 = arith.addf %15, %17 : vector<8x64xf32>
    %cst_15 = arith.constant 0.000000e+00 : f32
    %19 = vector.broadcast %cst_15 : f32 to vector<8x64xf32>
    %20 = arith.maximumf %18, %19 : vector<8x64xf32>
    %c0_16 = arith.constant 0 : index
    %c0_17 = arith.constant 0 : index
    %21 = vector.load %arg8[%c0_16, %c0_17] : memref<64x16xf32, #tpu.memory_space<vmem>>, vector<64x16xf32>
    %cst_18 = arith.constant dense<0.000000e+00> : vector<8x16xf32>
    %22 = tpu.matmul %20, %21, %cst_18 {dimension_numbers = #tpu.dot_dimension_numbers<[1], [0], [0], [1], [0, 0, 1, 1], [], []>} : vector<8x64xf32>, vector<64x16xf32>, vector<8x16xf32> -> vector<8x16xf32>
    %c0_19 = arith.constant 0 : index
    %c0_20 = arith.constant 0 : index
    %23 = vector.load %arg9[%c0_19, %c0_20] : memref<1x16xf32, #tpu.memory_space<vmem>>, vector<1x16xf32>
    %24 = vector.broadcast %23 : vector<1x16xf32> to vector<8x16xf32>
    %25 = arith.addf %22, %24 : vector<8x16xf32>
    %c0_21 = arith.constant 0 : index
    %c0_22 = arith.constant 0 : index
    %26 = vector.load %arg10[%c0_21, %c0_22] : memref<8x16xf32, #tpu.memory_space<vmem>>, vector<8x16xf32>
    tpu.vector_store %arg10[%c0_21, %c0_22], %25 {strides = array<i32>} : memref<8x16xf32, #tpu.memory_space<vmem>>, vector<8x16xf32>,
    return
  }
  func.func @transform_0(%arg0: i32) -> (i32, i32) {
    %c0_i32 = arith.constant 0 : i32
    %c0_i32_0 = arith.constant 0 : i32
    return %arg0, %c0_i32 : i32, i32
  }
  func.func @transform_1(%arg0: i32) -> (i32, i32) {
    %c0_i32 = arith.constant 0 : i32
    %c0_i32_0 = arith.constant 0 : i32
    return %arg0, %c0_i32 : i32, i32
  }
  func.func @transform_2(%arg0: i32) -> (i32, i32) {
    %c0_i32 = arith.constant 0 : i32
    %c0_i32_0 = arith.constant 0 : i32
    %c0_i32_1 = arith.constant 0 : i32
    return %c0_i32, %c0_i32_0 : i32, i32
  }
  func.func @transform_3(%arg0: i32) -> (i32, i32) {
    %c0_i32 = arith.constant 0 : i32
    %c0_i32_0 = arith.constant 0 : i32
    %c0_i32_1 = arith.constant 0 : i32
    return %c0_i32, %c0_i32_0 : i32, i32
  }
  func.func @transform_4(%arg0: i32) -> (i32, i32) {
    %c0_i32 = arith.constant 0 : i32
    %c0_i32_0 = arith.constant 0 : i32
    %c0_i32_1 = arith.constant 0 : i32
    return %c0_i32, %c0_i32_0 : i32, i32
  }
  func.func @transform_5(%arg0: i32) -> (i32, i32) {
    %c0_i32 = arith.constant 0 : i32
    %c0_i32_0 = arith.constant 0 : i32
    %c0_i32_1 = arith.constant 0 : i32
    return %c0_i32, %c0_i32_0 : i32, i32
  }
  func.func @transform_6(%arg0: i32) -> (i32, i32) {
    %c0_i32 = arith.constant 0 : i32
    %c0_i32_0 = arith.constant 0 : i32
    %c0_i32_1 = arith.constant 0 : i32
    return %c0_i32, %c0_i32_0 : i32, i32
  }
  func.func @transform_7(%arg0: i32) -> (i32, i32) {
    %c0_i32 = arith.constant 0 : i32
    %c0_i32_0 = arith.constant 0 : i32
    %c0_i32_1 = arith.constant 0 : i32
    return %c0_i32, %c0_i32_0 : i32, i32
  }
  func.func @transform_8(%arg0: i32) -> (i32, i32) {
    %c0_i32 = arith.constant 0 : i32
    %c0_i32_0 = arith.constant 0 : i32
    %c0_i32_1 = arith.constant 0 : i32
    return %c0_i32, %c0_i32_0 : i32, i32
  }
  func.func @transform_9(%arg0: i32) -> (i32, i32) {
    %c0_i32 = arith.constant 0 : i32
    %c0_i32_0 = arith.constant 0 : i32
    return %arg0, %c0_i32 : i32, i32
  }
}

</mosaic_0001>

<llo_original>
// kernel: tpu_custom_call.1
$region0: #{tpu_custom_call.1}
  #allocation0 [shape = 'u32[]', space=smem, size = 0x4, offset = 0x4, fixed_abs, tag = 'smem constant byte address 0x4 - core index']
  #allocation1 [shape = 'u32[144,128]{1,0:T(1,128)}', space=vmem, size = 0x12000, scoped, tag = 'internal scratch']
  %s0 = inlined_call_operand.hbm [shape: f32[8,16], index: 0, kind: input, shape index: {}]
  %s1 = inlined_call_operand.vmem [shape: f32[8,1], index: 1, kind: input, shape index: {}]
  %s2 = inlined_call_operand.vmem [shape: f32[16,64], index: 2, kind: input, shape index: {}]
  %s3 = inlined_call_operand.vmem [shape: f32[1,64], index: 3, kind: input, shape index: {}]
  %s4 = inlined_call_operand.vmem [shape: f32[1,64], index: 4, kind: input, shape index: {}]
  %s5 = inlined_call_operand.vmem [shape: f32[64,64], index: 5, kind: input, shape index: {}]
  %s6 = inlined_call_operand.vmem [shape: f32[1,64], index: 6, kind: input, shape index: {}]
  %s7 = inlined_call_operand.vmem [shape: f32[64,16], index: 7, kind: input, shape index: {}]
  %s8 = inlined_call_operand.vmem [shape: f32[1,16], index: 8, kind: input, shape index: {}]
  %s9 = inlined_call_operand.hbm [shape: f32[8,16], index: 9, kind: output, shape index: {}]
  %s10 = sld [smem:[#allocation0]]
  $region50: #{tpu_custom_call.1} parent=0
    _
  %s12 = ssub.s32 1, %s10
  %s13 = scalar_select 0, %s12, %s10
  $region1: #{tpu_custom_call.1} parent=0
    #allocation2 [shape = 'u8[4096]{0}', space=vmem, size = 0x1000, scoped, tag = 'input window, operand 0, single buffered']
    #allocation3 [shape = 's32[1]{0}', space=sflag, size = 0x4, scoped, tag = 'scoped memory for tpu_custom_call.1']
    #allocation4 [shape = 's32[1]{0}', space=sflag, size = 0x4, scoped, tag = 'scoped memory for tpu_custom_call.1']
    #allocation5 [shape = 'u8[4096]{0}', space=vmem, size = 0x1000, scoped, tag = 'output window, operand 0, single buffered']
    %14 = vsyncpa [#allocation3], 0
    %15 = vsyncpa [#allocation4], 0
    // Predicated region
    $region2: #{tpu_custom_call.1} parent=1 // pred_check
      _
    $region3: #{tpu_custom_call.1} parent=1 // pred_check_branch
      %17 = sbr.rel (0) target = $region5
    $region4: #{tpu_custom_call.1} parent=1 // pred_region
      %s19 = ssub.s32 128, 128
      %20 = vsyncadd [#allocation3], %s19
      %s22 = sshll.u32 [#allocation2], 4
      %s23 = int_to_ptr.vmem [resolvable:$true] %s22
      %25 = dma.hbm_to_vmem [thread:$0]  %s0, 128, %s23, [#allocation3]
    $region5: #{tpu_custom_call.1} parent=1 // pred_fallthru
      _
    // Predicated region
    $region6: #{tpu_custom_call.1} parent=1 // pred_check
      _
    $region7: #{tpu_custom_call.1} parent=1 // pred_check_branch
      %27 = sbr.rel (0) target = $region9
    $region8: #{tpu_custom_call.1} parent=1 // pred_region
      _
    $region9: #{tpu_custom_call.1} parent=1 // pred_fallthru
      _
    // Predicated region
    $region10: #{tpu_custom_call.1} parent=1 // pred_check
      _
    $region11: #{tpu_custom_call.1} parent=1 // pred_check_branch
      %29 = sbr.rel (0) target = $region13
    $region12: #{tpu_custom_call.1} parent=1 // pred_region
      _
    $region13: #{tpu_custom_call.1} parent=1 // pred_fallthru
      _
    // Predicated region
    $region14: #{tpu_custom_call.1} parent=1 // pred_check
      _
    $region15: #{tpu_custom_call.1} parent=1 // pred_check_branch
      %31 = sbr.rel (0) target = $region17
    $region16: #{tpu_custom_call.1} parent=1 // pred_region
      _
    $region17: #{tpu_custom_call.1} parent=1 // pred_fallthru
      _
    // Predicated region
    $region18: #{tpu_custom_call.1} parent=1 // pred_check
      _
    $region19: #{tpu_custom_call.1} parent=1 // pred_check_branch
      %33 = sbr.rel (0) target = $region21
    $region20: #{tpu_custom_call.1} parent=1 // pred_region
      _
    $region21: #{tpu_custom_call.1} parent=1 // pred_fallthru
      _
    // Predicated region
    $region22: #{tpu_custom_call.1} parent=1 // pred_check
      _
    $region23: #{tpu_custom_call.1} parent=1 // pred_check_branch
      %35 = sbr.rel (0) target = $region25
    $region24: #{tpu_custom_call.1} parent=1 // pred_region
      _
    $region25: #{tpu_custom_call.1} parent=1 // pred_fallthru
      _
    // Predicated region
    $region26: #{tpu_custom_call.1} parent=1 // pred_check
      _
    $region27: #{tpu_custom_call.1} parent=1 // pred_check_branch
      %37 = sbr.rel (0) target = $region29
    $region28: #{tpu_custom_call.1} parent=1 // pred_region
      _
    $region29: #{tpu_custom_call.1} parent=1 // pred_fallthru
      _
    // Predicated region
    $region30: #{tpu_custom_call.1} parent=1 // pred_check
      _
    $region31: #{tpu_custom_call.1} parent=1 // pred_check_branch
      %39 = sbr.rel (0) target = $region33
    $region32: #{tpu_custom_call.1} parent=1 // pred_region
      _
    $region33: #{tpu_custom_call.1} parent=1 // pred_fallthru
      _
    // Predicated region
    $region34: #{tpu_custom_call.1} parent=1 // pred_check
      _
    $region35: #{tpu_custom_call.1} parent=1 // pred_check_branch
      %41 = sbr.rel (0) target = $region37
    $region36: #{tpu_custom_call.1} parent=1 // pred_region
      _
    $region37: #{tpu_custom_call.1} parent=1 // pred_fallthru
      _
    // Predicated region
    $region38: #{tpu_custom_call.1} parent=1 // pred_check
      _
    $region39: #{tpu_custom_call.1} parent=1 // pred_check_branch
      %43 = sbr.rel (0) target = $region41
    $region40: #{tpu_custom_call.1} parent=1 // pred_region
      %44 = dma.done [#allocation3], 128
    $region41: #{tpu_custom_call.1} parent=1 // pred_fallthru
      _
    %v45 = vld [vmem:[#allocation2] sm:$0xff]
    %v46 = vld [vmem:[%s1] sm:$0xff]
    %v47 = vld [vmem:[%s2] sm:$0xff]
    %v48 = vld [vmem:[%s2 + $0x8] sm:$0xff]
    %v49 = vld [vmem:[%s3] sm:$0x1]
    %51 = vset.pattern.permute.xlu0 0
    %52 = vperm.xlu0 %51, %v46
    %v53 = vpop.permute.xlu0 %52
    %v56 = vlaneseq
    %v57 = vshrl.u32 %v56, 7
    %v58 = vsub.s32 0, %v57
    %v59 = vrot.slane %v49, %v58
    %v61 = vmul.f32 %v53, %v59
    %vm62 = vcmask 130048
    %v64 = vsel %vm62, %v45, 0
    %66 = vmatprep.subr.mxu0 0.0
    %67 = vmatpush1.msra.mxu0 0.0
    %68 = vmatprep.subr.mxu0 0.0
    %69 = vmatpush1.msra.mxu0 0.0
    %70 = vmatprep.subr.mxu0 0.0
    %71 = vmatpush1.msra.mxu0 0.0
    %72 = vmatprep.subr.mxu0 0.0
    %73 = vmatpush1.msra.mxu0 0.0
    %74 = vmatprep.subr.mxu0 0.0
    %75 = vmatpush1.msra.mxu0 0.0
    %76 = vmatprep.subr.mxu0 0.0
    %77 = vmatpush1.msra.mxu0 0.0
    %78 = vmatprep.subr.mxu0 0.0
    %79 = vmatpush1.msra.mxu0 0.0
    %80 = vmatprep.subr.mxu0 0.0
    %81 = vmatpush1.msra.mxu0 0.0
    %82 = vmatprep.subr.mxu0 0.0
    %83 = vmatpush1.msra.mxu0 0.0
    %84 = vmatprep.subr.mxu0 0.0
    %85 = vmatpush1.msra.mxu0 0.0
    %86 = vmatprep.subr.mxu0 0.0
    %87 = vmatpush1.msra.mxu0 0.0
    %88 = vmatprep.subr.mxu0 0.0
    %89 = vmatpush1.msra.mxu0 0.0
    %90 = vmatprep.subr.mxu0 0.0
    %91 = vmatpush1.msra.mxu0 0.0
    %92 = vmatprep.subr.mxu0 0.0
    %93 = vmatpush1.msra.mxu0 0.0
    %94 = vmatprep.subr.mxu0 0.0
    %95 = vmatpush1.msra.mxu0 %v48
    %96 = vmatprep.subr.mxu0 0.0
    %97 = vmatpush1.msra.mxu0 %v47
    %98 = vmatprep.subr.mxu0 0.0
    %99 = vmatpush2.msra.mxu0 0.0
    %100 = vmatprep.subr.mxu0 0.0
    %101 = vmatpush2.msra.mxu0 0.0
    %102 = vmatprep.subr.mxu0 0.0
    %103 = vmatpush2.msra.mxu0 0.0
    %104 = vmatprep.subr.mxu0 0.0
    %105 = vmatpush2.msra.mxu0 0.0
    %106 = vmatprep.subr.mxu0 0.0
    %107 = vmatpush2.msra.mxu0 0.0
    %108 = vmatprep.subr.mxu0 0.0
    %109 = vmatpush2.msra.mxu0 0.0
    %110 = vmatprep.subr.mxu0 0.0
    %111 = vmatpush2.msra.mxu0 0.0
    %112 = vmatprep.subr.mxu0 0.0
    %113 = vmatpush2.msra.mxu0 0.0
    %114 = vmatprep.subr.mxu0 0.0
    %115 = vmatpush2.msra.mxu0 0.0
    %116 = vmatprep.subr.mxu0 0.0
    %117 = vmatpush2.msra.mxu0 0.0
    %118 = vmatprep.subr.mxu0 0.0
    %119 = vmatpush2.msra.mxu0 0.0
    %120 = vmatprep.subr.mxu0 0.0
    %121 = vmatpush2.msra.mxu0 0.0
    %122 = vmatprep.subr.mxu0 0.0
    %123 = vmatpush2.msra.mxu0 0.0
    %124 = vmatprep.subr.mxu0 0.0
    %125 = vmatpush2.msra.mxu0 0.0
    %126 = vmatprep.subr.mxu0 0.0
    %127 = vmatpush2.msra.mxu0 0.0
    %128 = vmatprep.subr.mxu0 0.0
    %129 = vmatpush2.msra.mxu0 0.0
    %130 = vmatprep.mubr.f32.mxu0 0.0
    %131 = vmatmul.mubr.f32.gmra.mxu0 %v64
    %v132 = vpop.f32.mrf.mxu0
    %v133 = vadd.f32 %v61, %v132
    %v134 = vpop.f32.mrf.mxu0
    %135 = vdwg.mxu0
    %v136 = vld [vmem:[%s4] sm:$0x1]
    %v138 = vlaneseq
    %v139 = vshrl.u32 %v138, 7
    %v140 = vsub.s32 0, %v139
    %v141 = vrot.slane %v136, %v140
    %v143 = vadd.f32 %v133, %v141
    %v144 = vmax.f32 %v143, 0.0
    %v145 = vld [vmem:[%s5] sm:$0xff]
    %v146 = vld [vmem:[%s5 + $0x8] sm:$0xff]
    %v147 = vld [vmem:[%s5 + $0x10] sm:$0xff]
    %v148 = vld [vmem:[%s5 + $0x18] sm:$0xff]
    %v149 = vld [vmem:[%s5 + $0x20] sm:$0xff]
    %v150 = vld [vmem:[%s5 + $0x28] sm:$0xff]
    %v151 = vld [vmem:[%s5 + $0x30] sm:$0xff]
    %v152 = vld [vmem:[%s5 + $0x38] sm:$0xff]
    %v153 = vld [vmem:[%s6] sm:$0x1]
    %v155 = vlaneseq
    %v156 = vshrl.u32 %v155, 7
    %v157 = vsub.s32 0, %v156
    %v158 = vrot.slane %v153, %v157
    %vm160 = vcmask 523264
    %v162 = vsel %vm160, %v144, 0
    %164 = vmatprep.subr.mxu0 0.0
    %165 = vmatpush1.msra.mxu0 0.0
    %166 = vmatprep.subr.mxu0 0.0
    %167 = vmatpush1.msra.mxu0 0.0
    %168 = vmatprep.subr.mxu0 0.0
    %169 = vmatpush1.msra.mxu0 0.0
    %170 = vmatprep.subr.mxu0 0.0
    %171 = vmatpush1.msra.mxu0 0.0
    %172 = vmatprep.subr.mxu0 0.0
    %173 = vmatpush1.msra.mxu0 0.0
    %174 = vmatprep.subr.mxu0 0.0
    %175 = vmatpush1.msra.mxu0 0.0
    %176 = vmatprep.subr.mxu0 0.0
    %177 = vmatpush1.msra.mxu0 0.0
    %178 = vmatprep.subr.mxu0 0.0
    %179 = vmatpush1.msra.mxu0 0.0
    %180 = vmatprep.subr.mxu0 0.0
    %181 = vmatpush1.msra.mxu0 %v152
    %182 = vmatprep.subr.mxu0 0.0
    %183 = vmatpush1.msra.mxu0 %v151
    %184 = vmatprep.subr.mxu0 0.0
    %185 = vmatpush1.msra.mxu0 %v150
    %186 = vmatprep.subr.mxu0 0.0
    %187 = vmatpush1.msra.mxu0 %v149
    %188 = vmatprep.subr.mxu0 0.0
    %189 = vmatpush1.msra.mxu0 %v148
    %190 = vmatprep.subr.mxu0 0.0
    %191 = vmatpush1.msra.mxu0 %v147
    %192 = vmatprep.subr.mxu0 0.0
    %193 = vmatpush1.msra.mxu0 %v146
    %194 = vmatprep.subr.mxu0 0.0
    %195 = vmatpush1.msra.mxu0 %v145
    %196 = vmatprep.subr.mxu0 0.0
    %197 = vmatpush2.msra.mxu0 0.0
    %198 = vmatprep.subr.mxu0 0.0
    %199 = vmatpush2.msra.mxu0 0.0
    %200 = vmatprep.subr.mxu0 0.0
    %201 = vmatpush2.msra.mxu0 0.0
    %202 = vmatprep.subr.mxu0 0.0
    %203 = vmatpush2.msra.mxu0 0.0
    %204 = vmatprep.subr.mxu0 0.0
    %205 = vmatpush2.msra.mxu0 0.0
    %206 = vmatprep.subr.mxu0 0.0
    %207 = vmatpush2.msra.mxu0 0.0
    %208 = vmatprep.subr.mxu0 0.0
    %209 = vmatpush2.msra.mxu0 0.0
    %210 = vmatprep.subr.mxu0 0.0
    %211 = vmatpush2.msra.mxu0 0.0
    %212 = vmatprep.subr.mxu0 0.0
    %213 = vmatpush2.msra.mxu0 0.0
    %214 = vmatprep.subr.mxu0 0.0
    %215 = vmatpush2.msra.mxu0 0.0
    %216 = vmatprep.subr.mxu0 0.0
    %217 = vmatpush2.msra.mxu0 0.0
    %218 = vmatprep.subr.mxu0 0.0
    %219 = vmatpush2.msra.mxu0 0.0
    %220 = vmatprep.subr.mxu0 0.0
    %221 = vmatpush2.msra.mxu0 0.0
    %222 = vmatprep.subr.mxu0 0.0
    %223 = vmatpush2.msra.mxu0 0.0
    %224 = vmatprep.subr.mxu0 0.0
    %225 = vmatpush2.msra.mxu0 0.0
    %226 = vmatprep.subr.mxu0 0.0
    %227 = vmatpush2.msra.mxu0 0.0
    %228 = vmatprep.mubr.f32.mxu0 0.0
    %229 = vmatmul.mubr.f32.gmra.mxu0 %v162
    %v230 = vpop.f32.mrf.mxu0
    %v231 = vadd.f32 %v158, %v230
    %v232 = vpop.f32.mrf.mxu0
    %233 = vdwg.mxu0
    %v234 = vmax.f32 %v231, 0.0
    %v235 = vld [vmem:[%s7] sm:$0xff]
    %v236 = vld [vmem:[%s7 + $0x8] sm:$0xff]
    %v237 = vld [vmem:[%s7 + $0x10] sm:$0xff]
    %v238 = vld [vmem:[%s7 + $0x18] sm:$0xff]
    %v239 = vld [vmem:[%s7 + $0x20] sm:$0xff]
    %v240 = vld [vmem:[%s7 + $0x28] sm:$0xff]
    %v241 = vld [vmem:[%s7 + $0x30] sm:$0xff]
    %v242 = vld [vmem:[%s7 + $0x38] sm:$0xff]
    %v243 = vld [vmem:[%s8] sm:$0x1]
    %v245 = vlaneseq
    %v246 = vshrl.u32 %v245, 7
    %v247 = vsub.s32 0, %v246
    %v248 = vrot.slane %v243, %v247
    %v251 = vsel %vm160, %v234, 0
    %253 = vmatprep.subr.mxu0 0.0
    %254 = vmatpush1.msra.mxu0 0.0
    %255 = vmatprep.subr.mxu0 0.0
    %256 = vmatpush1.msra.mxu0 0.0
    %257 = vmatprep.subr.mxu0 0.0
    %258 = vmatpush1.msra.mxu0 0.0
    %259 = vmatprep.subr.mxu0 0.0
    %260 = vmatpush1.msra.mxu0 0.0
    %261 = vmatprep.subr.mxu0 0.0
    %262 = vmatpush1.msra.mxu0 0.0
    %263 = vmatprep.subr.mxu0 0.0
    %264 = vmatpush1.msra.mxu0 0.0
    %265 = vmatprep.subr.mxu0 0.0
    %266 = vmatpush1.msra.mxu0 0.0
    %267 = vmatprep.subr.mxu0 0.0
    %268 = vmatpush1.msra.mxu0 0.0
    %269 = vmatprep.subr.mxu0 0.0
    %270 = vmatpush1.msra.mxu0 %v242
    %271 = vmatprep.subr.mxu0 0.0
    %272 = vmatpush1.msra.mxu0 %v241
    %273 = vmatprep.subr.mxu0 0.0
    %274 = vmatpush1.msra.mxu0 %v240
    %275 = vmatprep.subr.mxu0 0.0
    %276 = vmatpush1.msra.mxu0 %v239
    %277 = vmatprep.subr.mxu0 0.0
    %278 = vmatpush1.msra.mxu0 %v238
    %279 = vmatprep.subr.mxu0 0.0
    %280 = vmatpush1.msra.mxu0 %v237
    %281 = vmatprep.subr.mxu0 0.0
    %282 = vmatpush1.msra.mxu0 %v236
    %283 = vmatprep.subr.mxu0 0.0
    %284 = vmatpush1.msra.mxu0 %v235
    %285 = vmatprep.subr.mxu0 0.0
    %286 = vmatpush2.msra.mxu0 0.0
    %287 = vmatprep.subr.mxu0 0.0
    %288 = vmatpush2.msra.mxu0 0.0
    %289 = vmatprep.subr.mxu0 0.0
    %290 = vmatpush2.msra.mxu0 0.0
    %291 = vmatprep.subr.mxu0 0.0
    %292 = vmatpush2.msra.mxu0 0.0
    %293 = vmatprep.subr.mxu0 0.0
    %294 = vmatpush2.msra.mxu0 0.0
    %295 = vmatprep.subr.mxu0 0.0
    %296 = vmatpush2.msra.mxu0 0.0
    %297 = vmatprep.subr.mxu0 0.0
    %298 = vmatpush2.msra.mxu0 0.0
    %299 = vmatprep.subr.mxu0 0.0
    %300 = vmatpush2.msra.mxu0 0.0
    %301 = vmatprep.subr.mxu0 0.0
    %302 = vmatpush2.msra.mxu0 0.0
    %303 = vmatprep.subr.mxu0 0.0
    %304 = vmatpush2.msra.mxu0 0.0
    %305 = vmatprep.subr.mxu0 0.0
    %306 = vmatpush2.msra.mxu0 0.0
    %307 = vmatprep.subr.mxu0 0.0
    %308 = vmatpush2.msra.mxu0 0.0
    %309 = vmatprep.subr.mxu0 0.0
    %310 = vmatpush2.msra.mxu0 0.0
    %311 = vmatprep.subr.mxu0 0.0
    %312 = vmatpush2.msra.mxu0 0.0
    %313 = vmatprep.subr.mxu0 0.0
    %314 = vmatpush2.msra.mxu0 0.0
    %315 = vmatprep.subr.mxu0 0.0
    %316 = vmatpush2.msra.mxu0 0.0
    %317 = vmatprep.mubr.f32.mxu0 0.0
    %318 = vmatmul.mubr.f32.gmra.mxu0 %v251
    %v319 = vpop.f32.mrf.mxu0
    %v320 = vadd.f32 %v248, %v319
    %v321 = vpop.f32.mrf.mxu0
    %322 = vdwg.mxu0
    %323 = vst.msk [vmem:[#allocation5] sm:$0xff] %vm62, %v320
    // Predicated region
    $region42: #{tpu_custom_call.1} parent=1 // pred_check
      _
    $region43: #{tpu_custom_call.1} parent=1 // pred_check_branch
      %325 = sbr.rel (0) target = $region45
    $region44: #{tpu_custom_call.1} parent=1 // pred_region
      %s327 = ssub.s32 128, 128
      %328 = vsyncadd [#allocation4], %s327
      %s330 = sshll.u32 [#allocation5], 4
      %s331 = int_to_ptr.vmem [resolvable:$true] %s330
      %333 = dma.vmem_to_hbm [thread:$0]  %s331, 128, %s9, [#allocation4]
    $region45: #{tpu_custom_call.1} parent=1 // pred_fallthru
      _
    // Predicated region
    $region46: #{tpu_custom_call.1} parent=1 // pred_check
      _
    $region47: #{tpu_custom_call.1} parent=1 // pred_check_branch
      %335 = sbr.rel (0) target = $region49
    $region48: #{tpu_custom_call.1} parent=1 // pred_region
      %336 = dma.done [#allocation4], 128
    $region49: #{tpu_custom_call.1} parent=1 // pred_fallthru
      _
    %337 = vsyncpa [#allocation3], 1
    %338 = vsyncpa [#allocation4], 1

</llo_original>
